<compile_context>
chip_gen: v7x
topology: tpu7x:2x2x1
jax: 0.10.0
libtpu: 0.0.40
codegen_flags: <defaults>
</compile_context>

<pallas_src>
import functools

import jax
import jax.numpy as jnp
from jax.experimental import pallas as pl
from jax.experimental.pallas import tpu as pltpu


def _round_up(x, m):
    return ((x + m - 1) // m) * m


def _tpu_vmem_capacity():
    try:
        info = pltpu.get_tpu_info()
        cap = getattr(info, "vmem_capacity_bytes", None)
        if cap:
            return int(cap)
    except Exception:
        pass
    return 64 * 2 ** 20                            # conservative (v7x per-core)


def _tpu_num_cores():
    try:
        info = pltpu.get_tpu_info()
        for name in ("num_cores", "core_count", "num_tensorcores",
                     "tensorcores_per_chip", "cores_per_chip"):
            v = getattr(info, name, None)
            if v:
                return int(v)
    except Exception:
        pass
    return 1


def _choose_row_tile(N, Ho, s, Wp, cin_p, cout_p, kh, kw, out_bytes,
                     vmem_cap, num_cores):
    """Output-row tile th: biggest band fitting a VMEM budget, enough steps."""
    kk = kh * kw

    def footprint(th_):
        A = th_ * s
        AW = A * Wp
        BWp = (A + kh) * Wp
        band = cin_p * BWp * 2                     # bf16 input band block
        outb = cout_p * AW * out_bytes             # output block
        wts = cout_p * kk * cin_p * 2              # bf16 folded weights
        bias = cout_p * 4
        rhs = kk * cin_p * AW * 2                  # stacked-K scratch (1 copy)
        acc = cout_p * AW * 4                      # f32 matmul result temp
        return 2 * (band + outb + wts + bias) + rhs + acc   # 2x: double buffer

    budget = int(vmem_cap * 0.70)                  # Mosaic headroom (v7x-tight)
    th = max(1, Ho)
    while th > 1 and footprint(th) > budget:
        th = (th + 1) // 2

    # Keep enough grid steps for DMA pipelining / megacore sharding, but do
    # not shrink tiles on single-core parts for nothing.
    min_steps = 2 * num_cores if num_cores > 1 else 2
    while th > 1 and N * (-(-Ho // th)) < min_steps:
        th = (th + 1) // 2
    return th, footprint(th)


# --------------------------------------------------------------------------
# Pallas kernel: pack stacked-K RHS, one MXU matmul, bias + ReLU
# --------------------------------------------------------------------------
def _conv_block_kernel(band_ref, w_ref, b_ref, o_ref, rhs_ref, *,
                       kh, kw, Wp, AW, Cin_p):
    # band_ref: (Cin_p, (A+kh)*Wp) bf16  padded input rows (flat H*W) + halo
    # w_ref   : (Cout_p, kh*kw*Cin_p) bf16  taps folded into the contraction
    # b_ref   : (Cout_p, 1) f32
    # o_ref   : (Cout_p, AW)             dense (stride-1) correlation output
    # rhs_ref : (kh*kw*Cin_p, AW) bf16   stacked-K scratch (VMEM)
    for tap in range(kh * kw):
        i, j = divmod(tap, kw)
        off = i * Wp + j                           # static flat shift per tap
        rhs_ref[tap * Cin_p:(tap + 1) * Cin_p, :] = band_ref[:, off:off + AW]
    acc = jnp.dot(w_ref[...], rhs_ref[...], preferred_element_type=jnp.float32)
    o_ref[...] = jnp.maximum(acc + b_ref[...], 0.0).astype(o_ref.dtype)


# --------------------------------------------------------------------------
# Conv2dBlock forward:  relu(conv2d(x, W, b))  with NCHW in / NCHW out
# --------------------------------------------------------------------------
def conv2d_block_forward(x, weight, bias, *, stride=1, padding=0,
                         out_dtype=jnp.float32):
    """x: (N, Cin, H, W); weight: (Cout, Cin, kh, kw); bias: (Cout,)."""
    N, Cin, H, W = x.shape
    Cout, _, kh, kw = weight.shape
    s, p = stride, padding

    Ho = (H + 2 * p - kh) // s + 1
    Wo = (W + 2 * p - kw) // s + 1
    Wp = W + 2 * p
    KK = kh * kw

    Cin_p = _round_up(Cin, 16)                     # bf16 sublane packing
    Cout_p = _round_up(Cout, 8)
    out_bytes = 2 if out_dtype in (jnp.bfloat16, jnp.float16) else 4

    vmem_cap = _tpu_vmem_capacity()
    num_cores = _tpu_num_cores()
    th, fp = _choose_row_tile(N, Ho, s, Wp, Cin_p, Cout_p, kh, kw,
                              out_bytes, vmem_cap, num_cores)
    T = -(-Ho // th)                               # number of row bands
    A = th * s                                     # dense (stride-1) rows/band
    AW = A * Wp
    BWp = (A + kh) * Wp                            # band incl. kh-row halo
    Hp_total = T * A + kh                          # padded rows we provide

    # Pad channels / rows / cols once, cast to bf16, flatten H*W row-major.
    xp = jnp.pad(x, ((0, 0), (0, Cin_p - Cin),
                     (p, Hp_total - H - p), (p, p)))
    xp = xp.astype(jnp.bfloat16).reshape(N, Cin_p, Hp_total * Wp)

    if T == 1:
        band_arr = xp                              # no extra HBM copy
        band_spec = pl.BlockSpec((None, Cin_p, BWp), lambda n, t: (n, 0, 0))
    else:
        # TODO(synk): for T > 1 the overlapping row bands are materialized in
        # HBM (~(A+kh)/A extra input traffic); a manual-DMA halo pipeline
        # (memory_space=pl.ANY + pltpu.make_async_copy) would remove this copy.
        band_arr = jnp.stack(
            [jax.lax.slice_in_dim(xp, t * A * Wp, t * A * Wp + BWp, axis=2)
             for t in range(T)], axis=1)           # (N, T, Cin_p, BWp)
        band_spec = pl.BlockSpec((None, None, Cin_p, BWp),
                                 lambda n, t: (n, t, 0, 0))

    # Weights: (Cout, Cin, kh, kw) -> (Cout_p, kh*kw*Cin_p) bf16, lane-dense,
    # taps folded into the MXU contraction dim.
    wpad = jnp.pad(weight, ((0, Cout_p - Cout), (0, Cin_p - Cin),
                            (0, 0), (0, 0)))
    w2d = jnp.transpose(wpad, (0, 2, 3, 1)).reshape(
        Cout_p, KK * Cin_p).astype(jnp.bfloat16)
    b2d = jnp.pad(bias, (0, Cout_p - Cout)).astype(jnp.float32).reshape(
        Cout_p, 1)

    kern = functools.partial(_conv_block_kernel, kh=kh, kw=kw, Wp=Wp, AW=AW,
                             Cin_p=Cin_p)

    vmem_limit = int(min(int(vmem_cap * 0.8),
                         max(32 * 2 ** 20, fp + (4 << 20))))

    out = pl.pallas_call(
        kern,
        out_shape=jax.ShapeDtypeStruct((N, Cout_p, T, AW), out_dtype),
        grid=(N, T),
        in_specs=[
            band_spec,
            pl.BlockSpec((Cout_p, KK * Cin_p), lambda n, t: (0, 0)),
            pl.BlockSpec((Cout_p, 1), lambda n, t: (0, 0)),
        ],
        out_specs=pl.BlockSpec((None, Cout_p, None, AW),
                               lambda n, t: (n, 0, t, 0)),
        scratch_shapes=[pltpu.VMEM((KK * Cin_p, AW), jnp.bfloat16)],
        compiler_params=pltpu.CompilerParams(
            dimension_semantics=("parallel", "parallel"),
            vmem_limit_bytes=vmem_limit),
    )(band_arr, w2d, b2d)

    # (N, Cout_p, T, A*Wp) -> (N, Cout_p, T*A, Wp): free view, no transpose.
    out = out.reshape(N, Cout_p, T * A, Wp)
    # TODO(synk): stride > 1 computes the dense (stride-1) correlation and
    # subsamples here (~s^2 extra MXU work); fine for the module default s=1.
    y = out[:, :Cout, :(Ho - 1) * s + 1:s, :(Wo - 1) * s + 1:s]
    return y                                       # (N, Cout, Ho, Wo) NCHW


# --------------------------------------------------------------------------
# Deterministic parameter init (nn.Conv2d + xavier_uniform_ + zero bias)
# --------------------------------------------------------------------------
def init_conv2d_block_params(key, in_channels, out_channels, kernel_size):
    fan_in = in_channels * kernel_size * kernel_size
    fan_out = out_channels * kernel_size * kernel_size
    bound = (6.0 / (fan_in + fan_out)) ** 0.5
    weight = jax.random.uniform(
        key, (out_channels, in_channels, kernel_size, kernel_size),
        minval=-bound, maxval=bound, dtype=jnp.float32)
    bias = jnp.zeros((out_channels,), jnp.float32)
    return weight, bias


if __name__ == "__main__":
    N, Cin, H, W = 2, 4, 16, 16
    Cout, K, stride, padding = 8, 3, 1, 1

    key = jax.random.PRNGKey(0)
    kx, kw_ = jax.random.split(key)
    x = jax.random.normal(kx, (N, Cin, H, W), dtype=jnp.float32)
    weight, bias = init_conv2d_block_params(kw_, Cin, Cout, K)

    fwd = jax.jit(functools.partial(conv2d_block_forward,
                                    stride=stride, padding=padding))
    y = fwd(x, weight, bias)
    y = jax.block_until_ready(y)

    # Reference with the same bf16-rounded MXU operands (f32 accumulation);
    # only accumulation order differs.  NOTE: feeding the MXU in bf16 is an
    # intentional precision change vs PyTorch's f32 Conv2d.
    ref = jax.lax.conv_general_dilated(
        x.astype(jnp.bfloat16), weight.astype(jnp.bfloat16),
        window_strides=(stride, stride),
        padding=[(padding, padding), (padding, padding)],
        dimension_numbers=("NCHW", "OIHW", "NCHW"),
        preferred_element_type=jnp.float32)
    ref = jnp.maximum(ref + bias[None, :, None, None], 0.0)

    assert y.shape == (N, Cout, H, W), y.shape
    assert y.dtype == jnp.float32
    err = float(jnp.max(jnp.abs(y - ref)))
    assert err < 2e-2, f"max abs err {err}"

    print("KERNEL_OK")
</pallas_src>

<mosaic_0001>
module attributes {stable_mosaic.version = 11 : i64} {
  func.func @_conv_block_kernel(%arg0: i32, %arg1: i32, %arg2: memref<1x16x342xbf16, #tpu.memory_space<vmem>>, %arg3: memref<8x144xbf16, #tpu.memory_space<vmem>>, %arg4: memref<8x1xf32, #tpu.memory_space<vmem>>, %arg5: memref<1x8x1x288xf32, #tpu.memory_space<vmem>>, %arg6: memref<144x288xbf16, #tpu.memory_space<vmem>>) attributes {dimension_semantics = [#tpu.dimension_semantics<parallel>, #tpu.dimension_semantics<parallel>], iteration_bounds = array<i64: 2, 1>, scalar_prefetch = 0 : i64, scratch_operands = 1 : i64, tpu.core_type = #tpu.core_type<tc>, window_params = [{transform_indices = @transform_0, window_bounds = array<i64: 1, 16, 342>}, {pipeline_mode = #tpu.pipeline_mode<synchronous>, transform_indices = @transform_1, window_bounds = array<i64: 8, 144>}, {pipeline_mode = #tpu.pipeline_mode<synchronous>, transform_indices = @transform_2, window_bounds = array<i64: 8, 1>}, {transform_indices = @transform_3, window_bounds = array<i64: 1, 8, 1, 288>}]} {
    %c0 = arith.constant 0 : index
    %c0_0 = arith.constant 0 : index
    %c0_1 = arith.constant 0 : index
    %0 = vector.load %arg2[%c0, %c0_0, %c0_1] : memref<1x16x342xbf16, #tpu.memory_space<vmem>>, vector<1x16x288xbf16>
    %1 = vector.shape_cast %0 : vector<1x16x288xbf16> to vector<16x288xbf16>
    %c0_2 = arith.constant 0 : index
    %c0_3 = arith.constant 0 : index
    %2 = vector.load %arg6[%c0_2, %c0_3] : memref<144x288xbf16, #tpu.memory_space<vmem>>, vector<16x288xbf16>
    tpu.vector_store %arg6[%c0_2, %c0_3], %1 {strides = array<i32>} : memref<144x288xbf16, #tpu.memory_space<vmem>>, vector<16x288xbf16>,
    %c0_4 = arith.constant 0 : index
    %c0_5 = arith.constant 0 : index
    %c1 = arith.constant 1 : index
    %3 = vector.load %arg2[%c0_4, %c0_5, %c1] : memref<1x16x342xbf16, #tpu.memory_space<vmem>>, vector<1x16x288xbf16>
    %4 = vector.shape_cast %3 : vector<1x16x288xbf16> to vector<16x288xbf16>
    %c16 = arith.constant 16 : index
    %c0_6 = arith.constant 0 : index
    %5 = vector.load %arg6[%c16, %c0_6] : memref<144x288xbf16, #tpu.memory_space<vmem>>, vector<16x288xbf16>
    tpu.vector_store %arg6[%c16, %c0_6], %4 {strides = array<i32>} : memref<144x288xbf16, #tpu.memory_space<vmem>>, vector<16x288xbf16>,
    %c0_7 = arith.constant 0 : index
    %c0_8 = arith.constant 0 : index
    %c2 = arith.constant 2 : index
    %6 = vector.load %arg2[%c0_7, %c0_8, %c2] : memref<1x16x342xbf16, #tpu.memory_space<vmem>>, vector<1x16x288xbf16>
    %7 = vector.shape_cast %6 : vector<1x16x288xbf16> to vector<16x288xbf16>
    %c32 = arith.constant 32 : index
    %c0_9 = arith.constant 0 : index
    %8 = vector.load %arg6[%c32, %c0_9] : memref<144x288xbf16, #tpu.memory_space<vmem>>, vector<16x288xbf16>
    tpu.vector_store %arg6[%c32, %c0_9], %7 {strides = array<i32>} : memref<144x288xbf16, #tpu.memory_space<vmem>>, vector<16x288xbf16>,
    %c0_10 = arith.constant 0 : index
    %c0_11 = arith.constant 0 : index
    %c18 = arith.constant 18 : index
    %9 = vector.load %arg2[%c0_10, %c0_11, %c18] : memref<1x16x342xbf16, #tpu.memory_space<vmem>>, vector<1x16x288xbf16>
    %10 = vector.shape_cast %9 : vector<1x16x288xbf16> to vector<16x288xbf16>
    %c48 = arith.constant 48 : index
    %c0_12 = arith.constant 0 : index
    %11 = vector.load %arg6[%c48, %c0_12] : memref<144x288xbf16, #tpu.memory_space<vmem>>, vector<16x288xbf16>
    tpu.vector_store %arg6[%c48, %c0_12], %10 {strides = array<i32>} : memref<144x288xbf16, #tpu.memory_space<vmem>>, vector<16x288xbf16>,
    %c0_13 = arith.constant 0 : index
    %c0_14 = arith.constant 0 : index
    %c19 = arith.constant 19 : index
    %12 = vector.load %arg2[%c0_13, %c0_14, %c19] : memref<1x16x342xbf16, #tpu.memory_space<vmem>>, vector<1x16x288xbf16>
    %13 = vector.shape_cast %12 : vector<1x16x288xbf16> to vector<16x288xbf16>
    %c64 = arith.constant 64 : index
    %c0_15 = arith.constant 0 : index
    %14 = vector.load %arg6[%c64, %c0_15] : memref<144x288xbf16, #tpu.memory_space<vmem>>, vector<16x288xbf16>
    tpu.vector_store %arg6[%c64, %c0_15], %13 {strides = array<i32>} : memref<144x288xbf16, #tpu.memory_space<vmem>>, vector<16x288xbf16>,
    %c0_16 = arith.constant 0 : index
    %c0_17 = arith.constant 0 : index
    %c20 = arith.constant 20 : index
    %15 = vector.load %arg2[%c0_16, %c0_17, %c20] : memref<1x16x342xbf16, #tpu.memory_space<vmem>>, vector<1x16x288xbf16>
    %16 = vector.shape_cast %15 : vector<1x16x288xbf16> to vector<16x288xbf16>
    %c80 = arith.constant 80 : index
    %c0_18 = arith.constant 0 : index
    %17 = vector.load %arg6[%c80, %c0_18] : memref<144x288xbf16, #tpu.memory_space<vmem>>, vector<16x288xbf16>
    tpu.vector_store %arg6[%c80, %c0_18], %16 {strides = array<i32>} : memref<144x288xbf16, #tpu.memory_space<vmem>>, vector<16x288xbf16>,
    %c0_19 = arith.constant 0 : index
    %c0_20 = arith.constant 0 : index
    %c36 = arith.constant 36 : index
    %18 = vector.load %arg2[%c0_19, %c0_20, %c36] : memref<1x16x342xbf16, #tpu.memory_space<vmem>>, vector<1x16x288xbf16>
    %19 = vector.shape_cast %18 : vector<1x16x288xbf16> to vector<16x288xbf16>
    %c96 = arith.constant 96 : index
    %c0_21 = arith.constant 0 : index
    %20 = vector.load %arg6[%c96, %c0_21] : memref<144x288xbf16, #tpu.memory_space<vmem>>, vector<16x288xbf16>
    tpu.vector_store %arg6[%c96, %c0_21], %19 {strides = array<i32>} : memref<144x288xbf16, #tpu.memory_space<vmem>>, vector<16x288xbf16>,
    %c0_22 = arith.constant 0 : index
    %c0_23 = arith.constant 0 : index
    %c37 = arith.constant 37 : index
    %21 = vector.load %arg2[%c0_22, %c0_23, %c37] : memref<1x16x342xbf16, #tpu.memory_space<vmem>>, vector<1x16x288xbf16>
    %22 = vector.shape_cast %21 : vector<1x16x288xbf16> to vector<16x288xbf16>
    %c112 = arith.constant 112 : index
    %c0_24 = arith.constant 0 : index
    %23 = vector.load %arg6[%c112, %c0_24] : memref<144x288xbf16, #tpu.memory_space<vmem>>, vector<16x288xbf16>
    tpu.vector_store %arg6[%c112, %c0_24], %22 {strides = array<i32>} : memref<144x288xbf16, #tpu.memory_space<vmem>>, vector<16x288xbf16>,
    %c0_25 = arith.constant 0 : index
    %c0_26 = arith.constant 0 : index
    %c38 = arith.constant 38 : index
    %24 = vector.load %arg2[%c0_25, %c0_26, %c38] : memref<1x16x342xbf16, #tpu.memory_space<vmem>>, vector<1x16x288xbf16>
    %25 = vector.shape_cast %24 : vector<1x16x288xbf16> to vector<16x288xbf16>
    %c128 = arith.constant 128 : index
    %c0_27 = arith.constant 0 : index
    %26 = vector.load %arg6[%c128, %c0_27] : memref<144x288xbf16, #tpu.memory_space<vmem>>, vector<16x288xbf16>
    tpu.vector_store %arg6[%c128, %c0_27], %25 {strides = array<i32>} : memref<144x288xbf16, #tpu.memory_space<vmem>>, vector<16x288xbf16>,
    %c0_28 = arith.constant 0 : index
    %c0_29 = arith.constant 0 : index
    %27 = vector.load %arg3[%c0_28, %c0_29] : memref<8x144xbf16, #tpu.memory_space<vmem>>, vector<8x144xbf16>
    %c0_30 = arith.constant 0 : index
    %c0_31 = arith.constant 0 : index
    %28 = vector.load %arg6[%c0_30, %c0_31] : memref<144x288xbf16, #tpu.memory_space<vmem>>, vector<144x288xbf16>
    %cst = arith.constant dense<0.000000e+00> : vector<8x288xf32>
    %29 = tpu.matmul %27, %28, %cst {dimension_numbers = #tpu.dot_dimension_numbers<[1], [0], [0], [1], [0, 0, 1, 1], [], []>} : vector<8x144xbf16>, vector<144x288xbf16>, vector<8x288xf32> -> vector<8x288xf32>
    %c0_32 = arith.constant 0 : index
    %c0_33 = arith.constant 0 : index
    %30 = vector.load %arg4[%c0_32, %c0_33] : memref<8x1xf32, #tpu.memory_space<vmem>>, vector<8x1xf32>
    %31 = vector.broadcast %30 : vector<8x1xf32> to vector<8x288xf32>
    %32 = arith.addf %29, %31 : vector<8x288xf32>
    %cst_34 = arith.constant 0.000000e+00 : f32
    %33 = vector.broadcast %cst_34 : f32 to vector<8x288xf32>
    %34 = arith.maximumf %32, %33 : vector<8x288xf32>
    %c0_35 = arith.constant 0 : index
    %c0_36 = arith.constant 0 : index
    %c0_37 = arith.constant 0 : index
    %c0_38 = arith.constant 0 : index
    %35 = vector.load %arg5[%c0_35, %c0_36, %c0_37, %c0_38] : memref<1x8x1x288xf32, #tpu.memory_space<vmem>>, vector<1x8x1x288xf32>
    %36 = vector.shape_cast %35 : vector<1x8x1x288xf32> to vector<8x288xf32>
    %37 = vector.shape_cast %34 : vector<8x288xf32> to vector<1x8x1x288xf32>
    tpu.vector_store %arg5[%c0_35, %c0_36, %c0_37, %c0_38], %37 {strides = array<i32>} : memref<1x8x1x288xf32, #tpu.memory_space<vmem>>, vector<1x8x1x288xf32>,
    return
  }
  func.func @transform_0(%arg0: i32, %arg1: i32) -> (i32, i32, i32) {
    %c0_i32 = arith.constant 0 : i32
    %c0_i32_0 = arith.constant 0 : i32
    %c0_i32_1 = arith.constant 0 : i32
    return %arg0, %c0_i32, %c0_i32_0 : i32, i32, i32
  }
  func.func @transform_1(%arg0: i32, %arg1: i32) -> (i32, i32) {
    %c0_i32 = arith.constant 0 : i32
    %c0_i32_0 = arith.constant 0 : i32
    %c0_i32_1 = arith.constant 0 : i32
    return %c0_i32, %c0_i32_0 : i32, i32
  }
  func.func @transform_2(%arg0: i32, %arg1: i32) -> (i32, i32) {
    %c0_i32 = arith.constant 0 : i32
    %c0_i32_0 = arith.constant 0 : i32
    %c0_i32_1 = arith.constant 0 : i32
    return %c0_i32, %c0_i32_0 : i32, i32
  }
  func.func @transform_3(%arg0: i32, %arg1: i32) -> (i32, i32, i32, i32) {
    %c0_i32 = arith.constant 0 : i32
    %c0_i32_0 = arith.constant 0 : i32
    %c0_i32_1 = arith.constant 0 : i32
    return %arg0, %c0_i32, %arg1, %c0_i32_0 : i32, i32, i32, i32
  }
}

</mosaic_0001>

<llo_original>
// kernel: conv2d_block_forward.1
$region0: #{conv2d_block_forward.1}
  #allocation0 [shape = 'u32[]', space=smem, size = 0x4, offset = 0x4, fixed_abs, tag = 'smem constant byte address 0x4 - core index']
  #allocation1 [shape = 'u32[144,128]{1,0:T(1,128)}', space=vmem, size = 0x12000, scoped, tag = 'internal scratch']
  #allocation2 [shape = 'bf16[144,288]{1,0:T(16,128)(2,1)}', space=vmem, size = 0x1b000, scoped, tag = 'scratch operand']
  %s0 = inlined_call_operand.vmem [shape: bf16[2,16,342], index: 0, kind: input, shape index: {}]
  %s1 = inlined_call_operand.vmem [shape: bf16[8,144], index: 1, kind: input, shape index: {}]
  %s2 = inlined_call_operand.vmem [shape: f32[8,1], index: 2, kind: input, shape index: {}]
  %s3 = inlined_call_operand.vmem [shape: f32[2,8,1,288], index: 3, kind: output, shape index: {}]
  %s4 = sld [smem:[#allocation0]]
  $region45: #{conv2d_block_forward.1} parent=0
    _
  %s6 = ssub.s32 1, %s4
  %s7 = scalar_select 0, %s6, %s4
  loop: start=0, step=1, limit=4
  $region2: #{conv2d_block_forward.1} parent=0 // loop_pre_header
    _
  $region3: #{conv2d_block_forward.1} parent=0 // loop_header
    %s9 = sphi 0, %s13
    %p10 = scmp.ge.s32.totalorder %s9, 4
    %s16 = sphi 0, %s28
    %s17 = sphi 0, %s24
    %s18 = sphi 0, %s16
    %s19 = sphi 0, %s17
    %s20 = sphi 0, %s18
    %s21 = sphi 0, %s19
    %s31 = sphi 0, %s33
    %s34 = sphi 0, %s31
    %s35 = sphi 0, %s34
    %s51 = sphi 0, %s35
    %s55 = sphi 0, %s55
    %s57 = sphi 0, %s55
    %s58 = sphi 0, %s57
    %s72 = sphi 0, %s58
    %s76 = sphi 0, %s76
    %s78 = sphi 0, %s76
    %s79 = sphi 0, %s78
    %s93 = sphi 0, %s79
    %s101 = sphi 0, %s103
    %s104 = sphi 0, %s101
    %s105 = sphi 0, %s104
    %s121 = sphi 0, %s105
  $region4: #{conv2d_block_forward.1} parent=0 // loop_header_branch
    %12 = sbr.rel (%p10) target = $region8
  $region5: #{conv2d_block_forward.1} parent=0 // loop_body
    %s14 = ssub.s32 %s9, 1
    %s15 = ssub.s32 %s9, 2
    %s22 = sadd.s32 1, %s17
    %p23 = scmp.ge.s32.totalorder %s22, 1
    %s24 = scalar_select %p23, 0, %s22
    %s25 = sadd.s32 1, %s16
    %s26 = scalar_select %p23, %s25, %s16
    %p27 = scmp.ge.s32.totalorder %s26, 2
    %s28 = scalar_select %p27, 0, %s26
    %s29 = ssub.s32 %s16, %s28
    %p30 = scmp.eq.s32.totalorder %s29, 0
    %s32 = sadd.s32 %s31, 1
    %s33 = scalar_select %p30, %s31, %s32
    %p36 = pneg %p30
    %p37 = scmp.eq.s32.totalorder %s9, 1
    %p38 = por %p36, %p37
    %p39 = scmp.ne.s32.totalorder %s31, %s34
    %p40 = scmp.eq.s32.totalorder %s9, 0
    %p41 = por %p39, %p40
    %p42 = scmp.ne.s32.totalorder %s31, %s34
    %p43 = scmp.eq.s32.totalorder %s14, 1
    %p44 = por %p42, %p43
    %p45 = scmp.ne.s32.totalorder %s34, %s35
    %p46 = scmp.eq.s32.totalorder %s14, 0
    %p47 = por %p45, %p46
    %p48 = scmp.ne.s32.totalorder %s34, %s35
    %p49 = scmp.eq.s32.totalorder %s15, 1
    %p50 = por %p48, %p49
    %p52 = scmp.ne.s32.totalorder %s35, %s51
    %p53 = scmp.eq.s32.totalorder %s15, 0
    %p54 = por %p52, %p53
    %s56 = sadd.s32 %s55, 1
    %p59 = scmp.eq.s32.totalorder %s9, 1
    %p60 = scmp.ne.s32.totalorder %s55, %s57
    %p61 = scmp.eq.s32.totalorder %s9, 0
    %p62 = por %p60, %p61
    %p63 = scmp.ne.s32.totalorder %s55, %s57
    %p64 = scmp.eq.s32.totalorder %s14, 1
    %p65 = por %p63, %p64
    %p66 = scmp.ne.s32.totalorder %s57, %s58
    %p67 = scmp.eq.s32.totalorder %s14, 0
    %p68 = por %p66, %p67
    %p69 = scmp.ne.s32.totalorder %s57, %s58
    %p70 = scmp.eq.s32.totalorder %s15, 1
    %p71 = por %p69, %p70
    %p73 = scmp.ne.s32.totalorder %s58, %s72
    %p74 = scmp.eq.s32.totalorder %s15, 0
    %p75 = por %p73, %p74
    %s77 = sadd.s32 %s76, 1
    %p80 = scmp.eq.s32.totalorder %s9, 1
    %p81 = scmp.ne.s32.totalorder %s76, %s78
    %p82 = scmp.eq.s32.totalorder %s9, 0
    %p83 = por %p81, %p82
    %p84 = scmp.ne.s32.totalorder %s76, %s78
    %p85 = scmp.eq.s32.totalorder %s14, 1
    %p86 = por %p84, %p85
    %p87 = scmp.ne.s32.totalorder %s78, %s79
    %p88 = scmp.eq.s32.totalorder %s14, 0
    %p89 = por %p87, %p88
    %p90 = scmp.ne.s32.totalorder %s78, %s79
    %p91 = scmp.eq.s32.totalorder %s15, 1
    %p92 = por %p90, %p91
    %p94 = scmp.ne.s32.totalorder %s79, %s93
    %p95 = scmp.eq.s32.totalorder %s15, 0
    %p96 = por %p94, %p95
    %s97 = ssub.s32 %s16, %s28
    %s98 = ssub.s32 %s17, %s24
    %s99 = sor.u32 %s97, %s98
    %p100 = scmp.eq.s32.totalorder %s99, 0
    %s102 = sadd.s32 %s101, 1
    %s103 = scalar_select %p100, %s101, %s102
    %p106 = pneg %p100
    %p107 = scmp.eq.s32.totalorder %s9, 1
    %p108 = por %p106, %p107
    %p109 = scmp.ne.s32.totalorder %s101, %s104
    %p110 = scmp.eq.s32.totalorder %s9, 0
    %p111 = por %p109, %p110
    %p112 = scmp.ne.s32.totalorder %s101, %s104
    %p113 = scmp.eq.s32.totalorder %s14, 1
    %p114 = por %p112, %p113
    %p115 = scmp.ne.s32.totalorder %s104, %s105
    %p116 = scmp.eq.s32.totalorder %s14, 0
    %p117 = por %p115, %p116
    %p118 = scmp.ne.s32.totalorder %s104, %s105
    %p119 = scmp.eq.s32.totalorder %s15, 1
    %p120 = por %p118, %p119
    %p122 = scmp.ne.s32.totalorder %s105, %s121
    %p123 = scmp.eq.s32.totalorder %s15, 0
    %p124 = por %p122, %p123
    %p125 = scmp.le.s32.totalorder 1, %s9
    %p126 = scmp.lt.s32.totalorder %s9, 3
    %p127 = pnand %p125, %p126
    %p128 = pneg %p127
    // Predicated region
    $region9: #{conv2d_block_forward.1} parent=5 // pred_check
      _
    $region10: #{conv2d_block_forward.1} parent=5 // pred_check_branch
      %130 = sbr.rel (%p127) target = $region12
    $region11: #{conv2d_block_forward.1} parent=5 // pred_region
      %s131 = ssub.s32 %s9, 1
      // Predicated region
      $region13: #{conv2d_block_forward.1} parent=11 // pred_check
        %p132 = pneg %p68
      $region14: #{conv2d_block_forward.1} parent=11 // pred_check_branch
        %134 = sbr.rel (%p132) target = $region16
      $region15: #{conv2d_block_forward.1} parent=11 // pred_region
        _
      $region16: #{conv2d_block_forward.1} parent=11 // pred_fallthru
        _
      // Predicated region
      $region17: #{conv2d_block_forward.1} parent=11 // pred_check
        %p135 = pneg %p89
      $region18: #{conv2d_block_forward.1} parent=11 // pred_check_branch
        %137 = sbr.rel (%p135) target = $region20
      $region19: #{conv2d_block_forward.1} parent=11 // pred_region
        _
      $region20: #{conv2d_block_forward.1} parent=11 // pred_fallthru
        _
    $region12: #{conv2d_block_forward.1} parent=5 // pred_fallthru
      _
    %p138 = scmp.lt.s32.totalorder %s9, 2
    // Predicated region
    $region21: #{conv2d_block_forward.1} parent=5 // pred_check
      %p139 = pneg %p138
    $region22: #{conv2d_block_forward.1} parent=5 // pred_check_branch
      %141 = sbr.rel (%p139) target = $region24
    $region23: #{conv2d_block_forward.1} parent=5 // pred_region
      // Predicated region
      $region25: #{conv2d_block_forward.1} parent=23 // pred_check
        %p142 = pneg %p41
      $region26: #{conv2d_block_forward.1} parent=23 // pred_check_branch
        %144 = sbr.rel (%p142) target = $region28
      $region27: #{conv2d_block_forward.1} parent=23 // pred_region
        %p145 = scmp.lt.s32.totalorder %s16, 1
        %s146 = scalar_select %p145, %s16, 1
        %s147 = smul.addr %s146, 6
        %s148 = smul.addr %s147, 4
        %s149 = scalar_lea.vmem %s0, %s148
      $region28: #{conv2d_block_forward.1} parent=23 // pred_fallthru
        _
    $region24: #{conv2d_block_forward.1} parent=5 // pred_fallthru
      _
    %p150 = scmp.le.s32.totalorder 1, %s9
    %p151 = scmp.lt.s32.totalorder %s9, 3
    %p152 = pnand %p150, %p151
    %p153 = pneg %p152
    // Predicated region
    $region29: #{conv2d_block_forward.1} parent=5 // pred_check
      _
    $region30: #{conv2d_block_forward.1} parent=5 // pred_check_branch
      %155 = sbr.rel (%p152) target = $region32
    $region31: #{conv2d_block_forward.1} parent=5 // pred_region
      %s156 = ssub.s32 %s9, 1
      %p157 = scmp.lt.s32.totalorder %s18, 1
      %s158 = scalar_select %p157, %s18, 1
      %s159 = smul.addr %s158, 6
      %s160 = smul.addr %s159, 4
      %s161 = scalar_lea.vmem %s0, %s160
      %p162 = pneg %p47
      %p163 = pneg %p44
      %p164 = pneg %p68
      %p165 = pneg %p65
      %p166 = pneg %p89
      %p167 = pneg %p86
      %p168 = pneg %p117
      %p169 = pneg %p114
      %p170 = scmp.lt.s32.totalorder %s18, 1
      %s171 = scalar_select %p170, %s18, 1
      %p172 = scmp.lt.s32.totalorder %s19, 0
      %s173 = scalar_select %p172, %s19, 0
      %s174 = smul.addr %s173, 3
      %s175 = smul.addr %s171, 24
      %s176 = sadd.s32 %s174, %s175
      %s177 = scalar_lea.vmem %s3, %s176
      %p178 = scmp.lt.s32.totalorder %s18, 1
      %s179 = scalar_select %p178, %s18, 1
      %s180 = smul.addr %s179, 6
      %s181 = smul.addr %s180, 4
      %s182 = scalar_lea.vmem %s0, %s181
      %p183 = scmp.lt.s32.totalorder %s18, 1
      %s184 = scalar_select %p183, %s18, 1
      %p185 = scmp.lt.s32.totalorder %s19, 0
      %s186 = scalar_select %p185, %s19, 0
      %s187 = smul.addr %s186, 3
      %s188 = smul.addr %s184, 24
      %s189 = sadd.s32 %s187, %s188
      %s190 = scalar_lea.vmem %s3, %s189
      %v192 = vld [vmem:[%s182] sm:$0xff]
      %v193 = vld [vmem:[%s182 + $0x8] sm:$0xf]
      %v194 = vld [vmem:[%s182 + $0xc] sm:$0xff]
      %v195 = vld [vmem:[%s182 + $0x14] sm:$0xf]
      %v200 = vunpack.c.l.b16 %v192
      %v201 = vunpack.c.h.b16 %v192
      %v202 = vunpack.c.l.b16 %v193
      %v203 = vunpack.c.l.b16 %v194
      %v204 = vunpack.c.h.b16 %v194
      %v205 = vunpack.c.l.b16 %v195
      %v206 = vpack.c.b16 %v203, %v200
      %v207 = vpack.c.b16 %v204, %v201
      %v208 = vpack.c.b16 %v205, %v202
      %212 = vst [vmem:[#allocation2] sm:$0xff] %v206
      %213 = vst [vmem:[#allocation2 + $0x8] sm:$0xff] %v207
      %vm214 = vcmask 261120
      %215 = vst.msk [vmem:[#allocation2 + $0x10] sm:$0xff] %vm214, %v208
      %v216 = vld [vmem:[%s182] sm:$0xff]
      %v217 = vld [vmem:[%s182 + $0x8] sm:$0xf]
      %v218 = vld [vmem:[%s182 + $0xc] sm:$0xff]
      %v219 = vld [vmem:[%s182 + $0x14] sm:$0xf]
      %v224 = vunpack.c.l.b16 %v216
      %v225 = vunpack.c.h.b16 %v216
      %v226 = vunpack.c.l.b16 %v217
      %v227 = vunpack.c.l.b16 %v218
      %v228 = vunpack.c.h.b16 %v218
      %v229 = vunpack.c.l.b16 %v219
      %v230 = vpack.c.b16 %v227, %v224
      %v231 = vpack.c.b16 %v228, %v225
      %v232 = vpack.c.b16 %v229, %v226
      %233 = vrot.lane.b32.xlu0 %v230, 127
      %v234 = vpop.permute.xlu0 %233
      %235 = vrot.lane.b32.xlu0 %v231, 127
      %v236 = vpop.permute.xlu0 %235
      %237 = vrot.lane.b32.xlu0 %v232, 127
      %v238 = vpop.permute.xlu0 %237
      %vm239 = vcmask 1039360
      %v240 = vsel %vm239, %v234, %v236
      %v241 = vsel %vm239, %v236, %v238
      %245 = vst [vmem:[#allocation2 + $0x18] sm:$0xff] %v240
      %246 = vst [vmem:[#allocation2 + $0x20] sm:$0xff] %v241
      %247 = vst.msk [vmem:[#allocation2 + $0x28] sm:$0xff] %vm214, %v238
      %v248 = vld [vmem:[%s182] sm:$0xff]
      %v249 = vld [vmem:[%s182 + $0x8] sm:$0xf]
      %v250 = vld [vmem:[%s182 + $0xc] sm:$0xff]
      %v251 = vld [vmem:[%s182 + $0x14] sm:$0xf]
      %v256 = vunpack.c.l.b16 %v248
      %v257 = vunpack.c.h.b16 %v248
      %v258 = vunpack.c.l.b16 %v249
      %v259 = vunpack.c.l.b16 %v250
      %v260 = vunpack.c.h.b16 %v250
      %v261 = vunpack.c.l.b16 %v251
      %v262 = vpack.c.b16 %v259, %v256
      %v263 = vpack.c.b16 %v260, %v257
      %v264 = vpack.c.b16 %v261, %v258
      %265 = vrot.lane.b32.xlu0 %v262, 126
      %v266 = vpop.permute.xlu0 %265
      %267 = vrot.lane.b32.xlu0 %v263, 126
      %v268 = vpop.permute.xlu0 %267
      %269 = vrot.lane.b32.xlu0 %v264, 126
      %v270 = vpop.permute.xlu0 %269
      %vm271 = vcmask 1031168
      %v272 = vsel %vm271, %v266, %v268
      %v273 = vsel %vm271, %v268, %v270
      %277 = vst [vmem:[#allocation2 + $0x30] sm:$0xff] %v272
      %278 = vst [vmem:[#allocation2 + $0x38] sm:$0xff] %v273
      %279 = vst.msk [vmem:[#allocation2 + $0x40] sm:$0xff] %vm214, %v270
      %v280 = vld [vmem:[%s182] sm:$0xff]
      %v281 = vld [vmem:[%s182 + $0x8] sm:$0xf]
      %v282 = vld [vmem:[%s182 + $0xc] sm:$0xff]
      %v283 = vld [vmem:[%s182 + $0x14] sm:$0xf]
      %v288 = vunpack.c.l.b16 %v280
      %v289 = vunpack.c.h.b16 %v280
      %v290 = vunpack.c.l.b16 %v281
      %v291 = vunpack.c.l.b16 %v282
      %v292 = vunpack.c.h.b16 %v282
      %v293 = vunpack.c.l.b16 %v283
      %v294 = vpack.c.b16 %v291, %v288
      %v295 = vpack.c.b16 %v292, %v289
      %v296 = vpack.c.b16 %v293, %v290
      %297 = vrot.lane.b32.xlu0 %v294, 110
      %v298 = vpop.permute.xlu0 %297
      %299 = vrot.lane.b32.xlu0 %v295, 110
      %v300 = vpop.permute.xlu0 %299
      %301 = vrot.lane.b32.xlu0 %v296, 110
      %v302 = vpop.permute.xlu0 %301
      %vm303 = vcmask 900096
      %v304 = vsel %vm303, %v298, %v300
      %v305 = vsel %vm303, %v300, %v302
      %309 = vst [vmem:[#allocation2 + $0x48] sm:$0xff] %v304
      %310 = vst [vmem:[#allocation2 + $0x50] sm:$0xff] %v305
      %311 = vst.msk [vmem:[#allocation2 + $0x58] sm:$0xff] %vm214, %v302
      %v312 = vld [vmem:[%s182] sm:$0xff]
      %v313 = vld [vmem:[%s182 + $0x8] sm:$0xf]
      %v314 = vld [vmem:[%s182 + $0xc] sm:$0xff]
      %v315 = vld [vmem:[%s182 + $0x14] sm:$0xf]
      %v320 = vunpack.c.l.b16 %v312
      %v321 = vunpack.c.h.b16 %v312
      %v322 = vunpack.c.l.b16 %v313
      %v323 = vunpack.c.l.b16 %v314
      %v324 = vunpack.c.h.b16 %v314
      %v325 = vunpack.c.l.b16 %v315
      %v326 = vpack.c.b16 %v323, %v320
      %v327 = vpack.c.b16 %v324, %v321
      %v328 = vpack.c.b16 %v325, %v322
      %329 = vrot.lane.b32.xlu0 %v326, 109
      %v330 = vpop.permute.xlu0 %329
      %331 = vrot.lane.b32.xlu0 %v327, 109
      %v332 = vpop.permute.xlu0 %331
      %333 = vrot.lane.b32.xlu0 %v328, 109
      %v334 = vpop.permute.xlu0 %333
      %vm335 = vcmask 891904
      %v336 = vsel %vm335, %v330, %v332
      %v337 = vsel %vm335, %v332, %v334
      %341 = vst [vmem:[#allocation2 + $0x60] sm:$0xff] %v336
      %342 = vst [vmem:[#allocation2 + $0x68] sm:$0xff] %v337
      %343 = vst.msk [vmem:[#allocation2 + $0x70] sm:$0xff] %vm214, %v334
      %v344 = vld [vmem:[%s182] sm:$0xff]
      %v345 = vld [vmem:[%s182 + $0x8] sm:$0xf]
      %v346 = vld [vmem:[%s182 + $0xc] sm:$0xff]
      %v347 = vld [vmem:[%s182 + $0x14] sm:$0xf]
      %v352 = vunpack.c.l.b16 %v344
      %v353 = vunpack.c.h.b16 %v344
      %v354 = vunpack.c.l.b16 %v345
      %v355 = vunpack.c.l.b16 %v346
      %v356 = vunpack.c.h.b16 %v346
      %v357 = vunpack.c.l.b16 %v347
      %v358 = vpack.c.b16 %v355, %v352
      %v359 = vpack.c.b16 %v356, %v353
      %v360 = vpack.c.b16 %v357, %v354
      %361 = vrot.lane.b32.xlu0 %v358, 108
      %v362 = vpop.permute.xlu0 %361
      %363 = vrot.lane.b32.xlu0 %v359, 108
      %v364 = vpop.permute.xlu0 %363
      %365 = vrot.lane.b32.xlu0 %v360, 108
      %v366 = vpop.permute.xlu0 %365
      %vm367 = vcmask 883712
      %v368 = vsel %vm367, %v362, %v364
      %v369 = vsel %vm367, %v364, %v366
      %373 = vst [vmem:[#allocation2 + $0x78] sm:$0xff] %v368
      %374 = vst [vmem:[#allocation2 + $0x80] sm:$0xff] %v369
      %375 = vst.msk [vmem:[#allocation2 + $0x88] sm:$0xff] %vm214, %v366
      %v376 = vld [vmem:[%s182] sm:$0xff]
      %v377 = vld [vmem:[%s182 + $0x8] sm:$0xf]
      %v378 = vld [vmem:[%s182 + $0xc] sm:$0xff]
      %v379 = vld [vmem:[%s182 + $0x14] sm:$0xf]
      %v384 = vunpack.c.l.b16 %v376
      %v385 = vunpack.c.h.b16 %v376
      %v386 = vunpack.c.l.b16 %v377
      %v387 = vunpack.c.l.b16 %v378
      %v388 = vunpack.c.h.b16 %v378
      %v389 = vunpack.c.l.b16 %v379
      %v390 = vpack.c.b16 %v387, %v384
      %v391 = vpack.c.b16 %v388, %v385
      %v392 = vpack.c.b16 %v389, %v386
      %393 = vrot.lane.b32.xlu0 %v390, 92
      %v394 = vpop.permute.xlu0 %393
      %395 = vrot.lane.b32.xlu0 %v391, 92
      %v396 = vpop.permute.xlu0 %395
      %397 = vrot.lane.b32.xlu0 %v392, 92
      %v398 = vpop.permute.xlu0 %397
      %vm399 = vcmask 752640
      %v400 = vsel %vm399, %v394, %v396
      %v401 = vsel %vm399, %v396, %v398
      %405 = vst [vmem:[#allocation2 + $0x90] sm:$0xff] %v400
      %406 = vst [vmem:[#allocation2 + $0x98] sm:$0xff] %v401
      %407 = vst.msk [vmem:[#allocation2 + $0xa0] sm:$0xff] %vm214, %v398
      %v408 = vld [vmem:[%s182] sm:$0xff]
      %v409 = vld [vmem:[%s182 + $0x8] sm:$0xf]
      %v410 = vld [vmem:[%s182 + $0xc] sm:$0xff]
      %v411 = vld [vmem:[%s182 + $0x14] sm:$0xf]
      %v416 = vunpack.c.l.b16 %v408
      %v417 = vunpack.c.h.b16 %v408
      %v418 = vunpack.c.l.b16 %v409
      %v419 = vunpack.c.l.b16 %v410
      %v420 = vunpack.c.h.b16 %v410
      %v421 = vunpack.c.l.b16 %v411
      %v422 = vpack.c.b16 %v419, %v416
      %v423 = vpack.c.b16 %v420, %v417
      %v424 = vpack.c.b16 %v421, %v418
      %425 = vrot.lane.b32.xlu0 %v422, 91
      %v426 = vpop.permute.xlu0 %425
      %427 = vrot.lane.b32.xlu0 %v423, 91
      %v428 = vpop.permute.xlu0 %427
      %429 = vrot.lane.b32.xlu0 %v424, 91
      %v430 = vpop.permute.xlu0 %429
      %vm431 = vcmask 744448
      %v432 = vsel %vm431, %v426, %v428
      %v433 = vsel %vm431, %v428, %v430
      %437 = vst [vmem:[#allocation2 + $0xa8] sm:$0xff] %v432
      %438 = vst [vmem:[#allocation2 + $0xb0] sm:$0xff] %v433
      %439 = vst.msk [vmem:[#allocation2 + $0xb8] sm:$0xff] %vm214, %v430
      %v440 = vld [vmem:[%s182] sm:$0xff]
      %v441 = vld [vmem:[%s182 + $0x8] sm:$0xf]
      %v442 = vld [vmem:[%s182 + $0xc] sm:$0xff]
      %v443 = vld [vmem:[%s182 + $0x14] sm:$0xf]
      %v448 = vunpack.c.l.b16 %v440
      %v449 = vunpack.c.h.b16 %v440
      %v450 = vunpack.c.l.b16 %v441
      %v451 = vunpack.c.l.b16 %v442
      %v452 = vunpack.c.h.b16 %v442
      %v453 = vunpack.c.l.b16 %v443
      %v454 = vpack.c.b16 %v451, %v448
      %v455 = vpack.c.b16 %v452, %v449
      %v456 = vpack.c.b16 %v453, %v450
      %457 = vrot.lane.b32.xlu0 %v454, 90
      %v458 = vpop.permute.xlu0 %457
      %459 = vrot.lane.b32.xlu0 %v455, 90
      %v460 = vpop.permute.xlu0 %459
      %461 = vrot.lane.b32.xlu0 %v456, 90
      %v462 = vpop.permute.xlu0 %461
      %vm463 = vcmask 736256
      %v464 = vsel %vm463, %v458, %v460
      %v465 = vsel %vm463, %v460, %v462
      %469 = vst [vmem:[#allocation2 + $0xc0] sm:$0xff] %v464
      %470 = vst [vmem:[#allocation2 + $0xc8] sm:$0xff] %v465
      %471 = vst.msk [vmem:[#allocation2 + $0xd0] sm:$0xff] %vm214, %v462
      %v472 = vld [vmem:[%s1] sm:$0xff]
      %v473 = vld [vmem:[#allocation2] sm:$0xff]
      %v474 = vld [vmem:[#allocation2 + $0x8] sm:$0xff]
      %v475 = vld [vmem:[#allocation2 + $0x10] sm:$0xff]
      %v476 = vld [vmem:[#allocation2 + $0x18] sm:$0xff]
      %v477 = vld [vmem:[#allocation2 + $0x20] sm:$0xff]
      %v478 = vld [vmem:[#allocation2 + $0x28] sm:$0xff]
      %v479 = vld [vmem:[#allocation2 + $0x30] sm:$0xff]
      %v480 = vld [vmem:[#allocation2 + $0x38] sm:$0xff]
      %v481 = vld [vmem:[#allocation2 + $0x40] sm:$0xff]
      %v482 = vld [vmem:[#allocation2 + $0x48] sm:$0xff]
      %v483 = vld [vmem:[#allocation2 + $0x50] sm:$0xff]
      %v484 = vld [vmem:[#allocation2 + $0x58] sm:$0xff]
      %v485 = vld [vmem:[#allocation2 + $0x60] sm:$0xff]
      %v486 = vld [vmem:[#allocation2 + $0x68] sm:$0xff]
      %v487 = vld [vmem:[#allocation2 + $0x70] sm:$0xff]
      %v488 = vld [vmem:[#allocation2 + $0x78] sm:$0xff]
      %v489 = vld [vmem:[#allocation2 + $0x80] sm:$0xff]
      %v490 = vld [vmem:[#allocation2 + $0x88] sm:$0xff]
      %v491 = vld [vmem:[#allocation2 + $0x90] sm:$0xff]
      %v492 = vld [vmem:[#allocation2 + $0x98] sm:$0xff]
      %v493 = vld [vmem:[#allocation2 + $0xa0] sm:$0xff]
      %v494 = vld [vmem:[#allocation2 + $0xa8] sm:$0xff]
      %v495 = vld [vmem:[#allocation2 + $0xb0] sm:$0xff]
      %v496 = vld [vmem:[#allocation2 + $0xb8] sm:$0xff]
      %v497 = vld [vmem:[#allocation2 + $0xc0] sm:$0xff]
      %v498 = vld [vmem:[#allocation2 + $0xc8] sm:$0xff]
      %v499 = vld [vmem:[#allocation2 + $0xd0] sm:$0xff]
      %v500 = vld [vmem:[%s2] sm:$0xff]
      %502 = vset.pattern.permute.xlu0 0
      %503 = vperm.xlu0 %502, %v500
      %v504 = vpop.permute.xlu0 %503
      %v507 = vunpack.c.l.b16 %v472
      %v508 = vunpack.c.h.b16 %v472
      %v509 = vpack.c.b16 %v507, %v507
      %v510 = vpack.c.b16 %v508, %v508
      %vm512 = vcmask 130048
      %v514 = vsel %vm512, %v510, 0
      %516 = vmatprep.subr.bf16.mxu0 %v474
      %517 = vmatpush1.bf16.msra.mxu0 %v473
      %518 = vmatprep.subr.bf16.mxu0 %v477
      %519 = vmatpush1.bf16.msra.mxu0 %v476
      %520 = vmatprep.subr.bf16.mxu0 %v480
      %521 = vmatpush1.bf16.msra.mxu0 %v479
      %522 = vmatprep.subr.bf16.mxu0 %v483
      %523 = vmatpush1.bf16.msra.mxu0 %v482
      %524 = vmatprep.subr.bf16.mxu0 %v486
      %525 = vmatpush1.bf16.msra.mxu0 %v485
      %526 = vmatprep.subr.bf16.mxu0 %v489
      %527 = vmatpush1.bf16.msra.mxu0 %v488
      %528 = vmatprep.subr.bf16.mxu0 %v492
      %529 = vmatpush1.bf16.msra.mxu0 %v491
      %530 = vmatprep.subr.bf16.mxu0 %v495
      %531 = vmatpush1.bf16.msra.mxu0 %v494
      %532 = vmatprep.subr.bf16.mxu0 %v498
      %533 = vmatpush1.bf16.msra.mxu0 %v497
      %534 = vmatprep.subr.bf16.mxu0 0
      %535 = vmatpush1.bf16.msra.mxu0 0
      %536 = vmatprep.subr.bf16.mxu0 0
      %537 = vmatpush1.bf16.msra.mxu0 0
      %538 = vmatprep.subr.bf16.mxu0 0
      %539 = vmatpush1.bf16.msra.mxu0 0
      %540 = vmatprep.subr.bf16.mxu0 0
      %541 = vmatpush1.bf16.msra.mxu0 0
      %542 = vmatprep.subr.bf16.mxu0 0
      %543 = vmatpush1.bf16.msra.mxu0 0
      %544 = vmatprep.subr.bf16.mxu0 0
      %545 = vmatpush1.bf16.msra.mxu0 0
      %546 = vmatprep.subr.bf16.mxu0 0
      %547 = vmatpush1.bf16.msra.mxu0 0
      %548 = vmatprep.mubr.bf16.mxu0 %v514
      %549 = vmatmul.mubr.bf16.gmra.mrb[0].mxu0 %v509
      %v550 = vpop.f32.mrb[0].mxu0
      %v551 = vadd.f32 %v504, %v550
      %v552 = vpop.f32.mrb[0].mxu0
      %v553 = vadd.f32 %v504, %v552
      %v554 = vpop.f32.mrb[0].mxu0
      %v555 = vpop.f32.mrb[0].mxu0
      %556 = vdwg.mxu0
      %557 = vmatprep.subr.bf16.mxu0 0
      %558 = vmatpush1.bf16.msra.mxu0 %v475
      %559 = vmatprep.subr.bf16.mxu0 0
      %560 = vmatpush1.bf16.msra.mxu0 %v478
      %561 = vmatprep.subr.bf16.mxu0 0
      %562 = vmatpush1.bf16.msra.mxu0 %v481
      %563 = vmatprep.subr.bf16.mxu0 0
      %564 = vmatpush1.bf16.msra.mxu0 %v484
      %565 = vmatprep.subr.bf16.mxu0 0
      %566 = vmatpush1.bf16.msra.mxu0 %v487
      %567 = vmatprep.subr.bf16.mxu0 0
      %568 = vmatpush1.bf16.msra.mxu0 %v490
      %569 = vmatprep.subr.bf16.mxu0 0
      %570 = vmatpush1.bf16.msra.mxu0 %v493
      %571 = vmatprep.subr.bf16.mxu0 0
      %572 = vmatpush1.bf16.msra.mxu0 %v496
      %573 = vmatprep.subr.bf16.mxu0 0
      %574 = vmatpush1.bf16.msra.mxu0 %v499
      %575 = vmatprep.subr.bf16.mxu0 0
      %576 = vmatpush1.bf16.msra.mxu0 0
      %577 = vmatprep.subr.bf16.mxu0 0
      %578 = vmatpush1.bf16.msra.mxu0 0
      %579 = vmatprep.subr.bf16.mxu0 0
      %580 = vmatpush1.bf16.msra.mxu0 0
      %581 = vmatprep.subr.bf16.mxu0 0
      %582 = vmatpush1.bf16.msra.mxu0 0
      %583 = vmatprep.subr.bf16.mxu0 0
      %584 = vmatpush1.bf16.msra.mxu0 0
      %585 = vmatprep.subr.bf16.mxu0 0
      %586 = vmatpush1.bf16.msra.mxu0 0
      %587 = vmatprep.subr.bf16.mxu0 0
      %588 = vmatpush1.bf16.msra.mxu0 0
      %589 = vmatprep.mubr.bf16.mxu0 %v514
      %590 = vmatmul.mubr.bf16.gmra.mrb[0].mxu0 %v509
      %v591 = vpop.f32.mrb[0].mxu0
      %v592 = vadd.f32 %v504, %v591
      %v593 = vpop.f32.mrb[0].mxu0
      %v594 = vpop.f32.mrb[0].mxu0
      %v595 = vpop.f32.mrb[0].mxu0
      %596 = vdwg.mxu0
      %v597 = vmax.f32 %v551, 0.0
      %v598 = vmax.f32 %v553, 0.0
      %v599 = vmax.f32 %v592, 0.0
      %v603 = vcombine.low %v597, %v598
      %v604 = vcombine.high %v597, %v598
      %v605 = vcombine.high %v599, %v599
      %v607 = vunpack.c.l.s4 1966171168
      %v608 = vunpack.c.0.s8 %v607
      %v609 = vlaneseq
      %v610 = vshrl.u32 %v609, 7
      %v611 = vsub.s32 %v608, %v610
      %v612 = vrot.slane %v603, %v611
      %v614 = vunpack.c.l.s4 1966171168
      %v615 = vunpack.c.0.s8 %v614
      %v616 = vlaneseq
      %v617 = vshrl.u32 %v616, 7
      %v618 = vsub.s32 %v615, %v617
      %v619 = vrot.slane %v604, %v618
      %v621 = vunpack.c.l.s4 1966171168
      %v622 = vunpack.c.0.s8 %v621
      %v623 = vlaneseq
      %v624 = vshrl.u32 %v623, 7
      %v625 = vsub.s32 %v622, %v624
      %v626 = vrot.slane %v599, %v625
      %v628 = vunpack.c.l.s4 1966171168
      %v629 = vunpack.c.0.s8 %v628
      %v630 = vlaneseq
      %v631 = vshrl.u32 %v630, 7
      %v632 = vsub.s32 %v629, %v631
      %v633 = vrot.slane %v605, %v632
      %v634 = vcombine.low %v612, %v626
      %v635 = vcombine.high %v612, %v626
      %v636 = vcombine.low %v619, %v633
      %v637 = vcombine.high %v619, %v633
      %v639 = vunpack.c.l.s4 1966171168
      %v640 = vunpack.c.0.s8 %v639
      %v641 = vlaneseq
      %v642 = vshrl.u32 %v641, 7
      %v643 = vsub.s32 %v640, %v642
      %v644 = vrot.slane %v634, %v643
      %v646 = vunpack.c.l.s4 1966171168
      %v647 = vunpack.c.0.s8 %v646
      %v648 = vlaneseq
      %v649 = vshrl.u32 %v648, 7
      %v650 = vsub.s32 %v647, %v649
      %v651 = vrot.slane %v636, %v650
      %v653 = vunpack.c.l.s4 1966171168
      %v654 = vunpack.c.0.s8 %v653
      %v655 = vlaneseq
      %v656 = vshrl.u32 %v655, 7
      %v657 = vsub.s32 %v654, %v656
      %v658 = vrot.slane %v635, %v657
      %v660 = vunpack.c.l.s4 1966171168
      %v661 = vunpack.c.0.s8 %v660
      %v662 = vlaneseq
      %v663 = vshrl.u32 %v662, 7
      %v664 = vsub.s32 %v661, %v663
      %v665 = vrot.slane %v637, %v664
      %v666 = vcombine.high %v644, %v644
      %v667 = vcombine.high %v651, %v651
      %v668 = vcombine.high %v658, %v658
      %v669 = vcombine.high %v665, %v665
      %v678 = vlaneseq
      %vm679 = vcmp.ge.s32.totalorder %v678, 0
      %vm680 = vcmp.lt.s32.totalorder %v678, 288
      %vm681 = vmand %vm679, %vm680
      %682 = vst.msk [vmem:[%s190] sm:$0x7] %vm681, %v644
      %683 = vst.msk [vmem:[%s190 + $0x3] sm:$0x7] %vm681, %v658
      %684 = vst.msk [vmem:[%s190 + $0x6] sm:$0x7] %vm681, %v666
      %685 = vst.msk [vmem:[%s190 + $0x9] sm:$0x7] %vm681, %v668
      %686 = vst.msk [vmem:[%s190 + $0xc] sm:$0x7] %vm681, %v651
      %687 = vst.msk [vmem:[%s190 + $0xf] sm:$0x7] %vm681, %v665
      %688 = vst.msk [vmem:[%s190 + $0x12] sm:$0x7] %vm681, %v667
      %689 = vst.msk [vmem:[%s190 + $0x15] sm:$0x7] %vm681, %v669
      %p690 = scmp.lt.s32.totalorder %s18, 1
      %s691 = scalar_select %p690, %s18, 1
      %p692 = scmp.lt.s32.totalorder %s19, 0
      %s693 = scalar_select %p692, %s19, 0
      %s694 = smul.addr %s693, 3
      %s695 = smul.addr %s691, 24
      %s696 = sadd.s32 %s694, %s695
      %s697 = scalar_lea.vmem %s3, %s696
      // Predicated region
      $region33: #{conv2d_block_forward.1} parent=31 // pred_check
        %p698 = pneg %p114
      $region34: #{conv2d_block_forward.1} parent=31 // pred_check_branch
        %700 = sbr.rel (%p698) target = $region36
      $region35: #{conv2d_block_forward.1} parent=31 // pred_region
        _
      $region36: #{conv2d_block_forward.1} parent=31 // pred_fallthru
        _
    $region32: #{conv2d_block_forward.1} parent=5 // pred_fallthru
      _
    %p701 = scmp.le.s32.totalorder 2, %s9
    // Predicated region
    $region37: #{conv2d_block_forward.1} parent=5 // pred_check
      %p702 = pneg %p701
    $region38: #{conv2d_block_forward.1} parent=5 // pred_check_branch
      %704 = sbr.rel (%p702) target = $region40
    $region39: #{conv2d_block_forward.1} parent=5 // pred_region
      %s705 = ssub.s32 %s9, 2
      // Predicated region
      $region41: #{conv2d_block_forward.1} parent=39 // pred_check
        %p706 = pneg %p120
      $region42: #{conv2d_block_forward.1} parent=39 // pred_check_branch
        %708 = sbr.rel (%p706) target = $region44
      $region43: #{conv2d_block_forward.1} parent=39 // pred_region
        %p709 = scmp.lt.s32.totalorder %s20, 1
        %s710 = scalar_select %p709, %s20, 1
        %p711 = scmp.lt.s32.totalorder %s21, 0
        %s712 = scalar_select %p711, %s21, 0
        %s713 = smul.addr %s712, 3
        %s714 = smul.addr %s710, 24
        %s715 = sadd.s32 %s713, %s714
        %s716 = scalar_lea.vmem %s3, %s715
      $region44: #{conv2d_block_forward.1} parent=39 // pred_fallthru
        _
    $region40: #{conv2d_block_forward.1} parent=5 // pred_fallthru
      _
  $region6: #{conv2d_block_forward.1} parent=0 // loop_footer
    %s13 = sadd.s32 1, %s9
  $region7: #{conv2d_block_forward.1} parent=0 // loop_footer_branch
    %8 = sbr.rel target = $region3
  $region8: #{conv2d_block_forward.1} parent=0 // loop_exit
    _

</llo_original>
